<compile_context>
chip_gen: v7x
topology: tpu7x:2x2x1
jax: 0.10.0
libtpu: 0.0.40
codegen_flags: <defaults>
</compile_context>

<pallas_src>
import functools

import jax
import jax.numpy as jnp
from jax.experimental import pallas as pl
from jax.experimental.pallas import tpu as pltpu

_MXU_DTYPE = jnp.bfloat16  # MXU-native operand dtype on every generation.


def _se_kernel(x_ref, xse_ref, w1t_ref, b1_ref, w2t_ref, b2_ref, o_ref):
    # conv_reduce: x_se @ W1^T + b1  (bf16 MXU operands, f32 accumulation).
    h = jnp.dot(xse_ref[...].astype(_MXU_DTYPE), w1t_ref[...],
                preferred_element_type=jnp.float32)
    h = h + b1_ref[...]                     # (1, C) bias broadcasts over rows

    # act1 = ReLU (f32).
    h = jnp.maximum(h, 0.0)

    # conv_expand: h @ W2^T + b2  (bf16 MXU operands, f32 accumulation).
    s = jnp.dot(h.astype(_MXU_DTYPE), w2t_ref[...],
                preferred_element_type=jnp.float32)
    s = s + b2_ref[...]

    # gate = sigmoid (f32 via EUP), then elementwise scale of x in the
    # activation dtype (bf16 VPU on v6e/v7x for bf16 inputs; f32 otherwise).
    gate = jax.nn.sigmoid(s)
    o_ref[...] = (x_ref[...] * gate.astype(x_ref.dtype)).astype(o_ref.dtype)


def _round_up(v, m):
    return (v + m - 1) // m * m


@functools.partial(jax.jit, static_argnames=("row_tile",))
def se_layer_linear(x, x_se, w1, b1, w2, b2, row_tile=512):
    """x, x_se: [B, N, C].  w1, w2: [C, C] (PyTorch Linear weight layout).
    b1, b2: [C]."""
    B, N, C = x.shape
    assert x_se.shape == x.shape, "this instantiation uses same-shape x / x_se"

    M = B * N
    dt = x.dtype

    # Row tile: multiple of 8, clamped so the grid has >= 2 steps when M
    # allows it (keeps both v7x TensorCores busy) and never exceeds row_tile.
    rt = max(8, min(row_tile, _round_up(pl.cdiv(M, 2), 8)))
    grid = (pl.cdiv(M, rt),)

    x2 = x.reshape(M, C)
    xse2 = x_se.reshape(M, C)

    # Pre-transpose weights once; bf16 MXU operands, f32 biases.
    w1t = w1.T.astype(_MXU_DTYPE)
    w2t = w2.T.astype(_MXU_DTYPE)
    b1r = b1.reshape(1, C).astype(jnp.float32)
    b2r = b2.reshape(1, C).astype(jnp.float32)

    row_spec = pl.BlockSpec((rt, C), lambda i: (i, 0))
    w_spec = pl.BlockSpec((C, C), lambda i: (0, 0))
    bias_spec = pl.BlockSpec((1, C), lambda i: (0, 0))

    # VMEM budget: 3 double-buffered row streams + double-buffered weights /
    # biases + f32 intermediates; capped below v7x's 64 MiB physical VMEM.
    itemsize = jnp.dtype(dt).itemsize
    vmem_need = (3 * 2 * rt * C * itemsize      # x, x_se, out (double-buffered)
                 + 2 * 2 * C * C * 2            # w1t, w2t (bf16, double-buffered)
                 + 2 * 2 * C * 4                # biases (f32, double-buffered)
                 + 4 * rt * C * 4)              # f32 intermediates headroom
    vmem_limit = int(min(max(2 * vmem_need, 16 * 1024 * 1024),
                         56 * 1024 * 1024))

    cost = pl.CostEstimate(
        flops=4 * M * C * C,                              # two M x C x C matmuls
        transcendentals=M * C,                            # sigmoid
        bytes_accessed=3 * M * C * itemsize + 2 * C * C * 2 + 2 * C * 4,
    )

    out = pl.pallas_call(
        _se_kernel,
        out_shape=jax.ShapeDtypeStruct((M, C), dt),
        grid_spec=pltpu.PrefetchScalarGridSpec(
            num_scalar_prefetch=0,
            grid=grid,
            in_specs=[row_spec, row_spec, w_spec, bias_spec, w_spec, bias_spec],
            out_specs=row_spec,
        ),
        compiler_params=pltpu.CompilerParams(
            dimension_semantics=("parallel",),
            vmem_limit_bytes=vmem_limit,
        ),
        cost_estimate=cost,
    )(x2, xse2, w1t, b1r, w2t, b2r)

    return out.reshape(B, N, C)


def _reference_f32(x, x_se, w1, b1, w2, b2):
    h = jnp.maximum(x_se @ w1.T + b1, 0.0)
    s = h @ w2.T + b2
    return x * jax.nn.sigmoid(s)


def _reference_mxu(x, x_se, w1, b1, w2, b2):
    # Mimics the kernel's bf16-operand / f32-accumulation matmul path.
    h = jnp.dot(x_se.astype(_MXU_DTYPE), w1.T.astype(_MXU_DTYPE),
                preferred_element_type=jnp.float32) + b1.astype(jnp.float32)
    h = jnp.maximum(h, 0.0)
    s = jnp.dot(h.astype(_MXU_DTYPE), w2.T.astype(_MXU_DTYPE),
                preferred_element_type=jnp.float32) + b2.astype(jnp.float32)
    gate = jax.nn.sigmoid(s)
    return (x * gate.astype(x.dtype)).astype(x.dtype)


if __name__ == "__main__":
    B, N, C = 2, 8, 32  # batch, tokens (queries), channels
    key = jax.random.PRNGKey(0)
    k1, k2, k3, k4, k5, k6 = jax.random.split(key, 6)

    x = jax.random.normal(k1, (B, N, C), dtype=jnp.float32)
    x_se = jax.random.normal(k2, (B, N, C), dtype=jnp.float32)

    # Deterministic parameter init (nn.Linear(channels, channels) shapes).
    bound = 1.0 / (C ** 0.5)
    w1 = jax.random.uniform(k3, (C, C), minval=-bound, maxval=bound, dtype=jnp.float32)
    b1 = jax.random.uniform(k4, (C,), minval=-bound, maxval=bound, dtype=jnp.float32)
    w2 = jax.random.uniform(k5, (C, C), minval=-bound, maxval=bound, dtype=jnp.float32)
    b2 = jax.random.uniform(k6, (C,), minval=-bound, maxval=bound, dtype=jnp.float32)

    out = se_layer_linear(x, x_se, w1, b1, w2, b2)
    out = jax.block_until_ready(out)
    assert out.shape == (B, N, C)

    # Tight check vs a reference that mirrors the bf16-operand MXU path.
    ref_mxu = _reference_mxu(x, x_se, w1, b1, w2, b2)
    assert jnp.allclose(out, ref_mxu, atol=1e-3, rtol=1e-3), "mismatch vs bf16-MXU reference"

    # Loose check vs the full-f32 PyTorch-equivalent reference (bf16 matmul
    # operands introduce a small, documented drift in the sigmoid gate).
    ref_f32 = _reference_f32(x, x_se, w1, b1, w2, b2)
    assert jnp.allclose(out, ref_f32, atol=3e-2, rtol=3e-2), "mismatch vs f32 reference"

    print("KERNEL_OK")
</pallas_src>

<mosaic_0001>
module attributes {stable_mosaic.version = 11 : i64} {
  func.func @_se_kernel(%arg0: i32, %arg1: memref<8x32xf32, #tpu.memory_space<vmem>>, %arg2: memref<8x32xf32, #tpu.memory_space<vmem>>, %arg3: memref<32x32xbf16, #tpu.memory_space<vmem>>, %arg4: memref<1x32xf32, #tpu.memory_space<vmem>>, %arg5: memref<32x32xbf16, #tpu.memory_space<vmem>>, %arg6: memref<1x32xf32, #tpu.memory_space<vmem>>, %arg7: memref<8x32xf32, #tpu.memory_space<vmem>>) attributes {dimension_semantics = [#tpu.dimension_semantics<parallel>], iteration_bounds = array<i64: 2>, scalar_prefetch = 0 : i64, scratch_operands = 0 : i64, tpu.core_type = #tpu.core_type<tc>, window_params = [{transform_indices = @transform_0, window_bounds = array<i64: 8, 32>}, {transform_indices = @transform_1, window_bounds = array<i64: 8, 32>}, {pipeline_mode = #tpu.pipeline_mode<synchronous>, transform_indices = @transform_2, window_bounds = array<i64: 32, 32>}, {pipeline_mode = #tpu.pipeline_mode<synchronous>, transform_indices = @transform_3, window_bounds = array<i64: 1, 32>}, {pipeline_mode = #tpu.pipeline_mode<synchronous>, transform_indices = @transform_4, window_bounds = array<i64: 32, 32>}, {pipeline_mode = #tpu.pipeline_mode<synchronous>, transform_indices = @transform_5, window_bounds = array<i64: 1, 32>}, {transform_indices = @transform_6, window_bounds = array<i64: 8, 32>}]} {
    %c0 = arith.constant 0 : index
    %c0_0 = arith.constant 0 : index
    %0 = vector.load %arg2[%c0, %c0_0] : memref<8x32xf32, #tpu.memory_space<vmem>>, vector<8x32xf32>
    %1 = arith.truncf %0 : vector<8x32xf32> to vector<8x32xbf16>
    %c0_1 = arith.constant 0 : index
    %c0_2 = arith.constant 0 : index
    %2 = vector.load %arg3[%c0_1, %c0_2] : memref<32x32xbf16, #tpu.memory_space<vmem>>, vector<32x32xbf16>
    %cst = arith.constant dense<0.000000e+00> : vector<8x32xf32>
    %3 = tpu.matmul %1, %2, %cst {dimension_numbers = #tpu.dot_dimension_numbers<[1], [0], [0], [1], [0, 0, 1, 1], [], []>} : vector<8x32xbf16>, vector<32x32xbf16>, vector<8x32xf32> -> vector<8x32xf32>
    %c0_3 = arith.constant 0 : index
    %c0_4 = arith.constant 0 : index
    %4 = vector.load %arg4[%c0_3, %c0_4] : memref<1x32xf32, #tpu.memory_space<vmem>>, vector<1x32xf32>
    %5 = vector.broadcast %4 : vector<1x32xf32> to vector<8x32xf32>
    %6 = arith.addf %3, %5 : vector<8x32xf32>
    %cst_5 = arith.constant 0.000000e+00 : f32
    %7 = vector.broadcast %cst_5 : f32 to vector<8x32xf32>
    %8 = arith.maximumf %6, %7 : vector<8x32xf32>
    %9 = arith.truncf %8 : vector<8x32xf32> to vector<8x32xbf16>
    %c0_6 = arith.constant 0 : index
    %c0_7 = arith.constant 0 : index
    %10 = vector.load %arg5[%c0_6, %c0_7] : memref<32x32xbf16, #tpu.memory_space<vmem>>, vector<32x32xbf16>
    %cst_8 = arith.constant dense<0.000000e+00> : vector<8x32xf32>
    %11 = tpu.matmul %9, %10, %cst_8 {dimension_numbers = #tpu.dot_dimension_numbers<[1], [0], [0], [1], [0, 0, 1, 1], [], []>} : vector<8x32xbf16>, vector<32x32xbf16>, vector<8x32xf32> -> vector<8x32xf32>
    %c0_9 = arith.constant 0 : index
    %c0_10 = arith.constant 0 : index
    %12 = vector.load %arg6[%c0_9, %c0_10] : memref<1x32xf32, #tpu.memory_space<vmem>>, vector<1x32xf32>
    %13 = vector.broadcast %12 : vector<1x32xf32> to vector<8x32xf32>
    %14 = arith.addf %11, %13 : vector<8x32xf32>
    %15 = arith.negf %14 : vector<8x32xf32>
    %16 = math.exp %15 : vector<8x32xf32>
    %cst_11 = arith.constant 1.000000e+00 : f32
    %17 = vector.broadcast %cst_11 : f32 to vector<8x32xf32>
    %18 = arith.addf %17, %16 : vector<8x32xf32>
    %19 = arith.divf %17, %18 : vector<8x32xf32>
    %c0_12 = arith.constant 0 : index
    %c0_13 = arith.constant 0 : index
    %20 = vector.load %arg1[%c0_12, %c0_13] : memref<8x32xf32, #tpu.memory_space<vmem>>, vector<8x32xf32>
    %21 = arith.mulf %20, %19 : vector<8x32xf32>
    %c0_14 = arith.constant 0 : index
    %c0_15 = arith.constant 0 : index
    %22 = vector.load %arg7[%c0_14, %c0_15] : memref<8x32xf32, #tpu.memory_space<vmem>>, vector<8x32xf32>
    tpu.vector_store %arg7[%c0_14, %c0_15], %21 {strides = array<i32>} : memref<8x32xf32, #tpu.memory_space<vmem>>, vector<8x32xf32>,
    return
  }
  func.func @transform_0(%arg0: i32) -> (i32, i32) {
    %c0_i32 = arith.constant 0 : i32
    %c0_i32_0 = arith.constant 0 : i32
    return %arg0, %c0_i32 : i32, i32
  }
  func.func @transform_1(%arg0: i32) -> (i32, i32) {
    %c0_i32 = arith.constant 0 : i32
    %c0_i32_0 = arith.constant 0 : i32
    return %arg0, %c0_i32 : i32, i32
  }
  func.func @transform_2(%arg0: i32) -> (i32, i32) {
    %c0_i32 = arith.constant 0 : i32
    %c0_i32_0 = arith.constant 0 : i32
    %c0_i32_1 = arith.constant 0 : i32
    return %c0_i32, %c0_i32_0 : i32, i32
  }
  func.func @transform_3(%arg0: i32) -> (i32, i32) {
    %c0_i32 = arith.constant 0 : i32
    %c0_i32_0 = arith.constant 0 : i32
    %c0_i32_1 = arith.constant 0 : i32
    return %c0_i32, %c0_i32_0 : i32, i32
  }
  func.func @transform_4(%arg0: i32) -> (i32, i32) {
    %c0_i32 = arith.constant 0 : i32
    %c0_i32_0 = arith.constant 0 : i32
    %c0_i32_1 = arith.constant 0 : i32
    return %c0_i32, %c0_i32_0 : i32, i32
  }
  func.func @transform_5(%arg0: i32) -> (i32, i32) {
    %c0_i32 = arith.constant 0 : i32
    %c0_i32_0 = arith.constant 0 : i32
    %c0_i32_1 = arith.constant 0 : i32
    return %c0_i32, %c0_i32_0 : i32, i32
  }
  func.func @transform_6(%arg0: i32) -> (i32, i32) {
    %c0_i32 = arith.constant 0 : i32
    %c0_i32_0 = arith.constant 0 : i32
    return %arg0, %c0_i32 : i32, i32
  }
}

</mosaic_0001>

<llo_original>
// kernel: se_layer_linear.1
$region0: #{se_layer_linear.1}
  #allocation0 [shape = 'u32[]', space=smem, size = 0x4, offset = 0x4, fixed_abs, tag = 'smem constant byte address 0x4 - core index']
  #allocation1 [shape = 'u32[144,128]{1,0:T(1,128)}', space=vmem, size = 0x12000, scoped, tag = 'internal scratch']
  %s0 = inlined_call_operand.vmem [shape: f32[16,32], index: 0, kind: input, shape index: {}]
  %s1 = inlined_call_operand.vmem [shape: f32[16,32], index: 1, kind: input, shape index: {}]
  %s2 = inlined_call_operand.vmem [shape: bf16[32,32], index: 2, kind: input, shape index: {}]
  %s3 = inlined_call_operand.vmem [shape: f32[1,32], index: 3, kind: input, shape index: {}]
  %s4 = inlined_call_operand.vmem [shape: bf16[32,32], index: 4, kind: input, shape index: {}]
  %s5 = inlined_call_operand.vmem [shape: f32[1,32], index: 5, kind: input, shape index: {}]
  %s6 = inlined_call_operand.hbm [shape: f32[16,32], index: 6, kind: output, shape index: {}]
  %s7 = sld [smem:[#allocation0]]
  $region57: #{se_layer_linear.1} parent=0
    _
  %s9 = ssub.s32 1, %s7
  %s10 = scalar_select 0, %s9, %s7
  $region1: #{se_layer_linear.1} parent=0
    #allocation2 [shape = 'u8[8192]{0}', space=vmem, size = 0x2000, scoped, tag = 'output window, operand 0']
    #allocation3 [shape = 's32[2]{0}', space=sflag, size = 0x8, scoped, tag = 'scoped memory for se_layer_linear.1']
    %11 = vsyncpa [#allocation3], 0
    %s12 = scalar_lea.sflag [#allocation3], 1
    %13 = vsyncpa %s12, 0
    loop: start=0, step=1, limit=4
    $region2: #{se_layer_linear.1} parent=1 // loop_pre_header
      _
    $region3: #{se_layer_linear.1} parent=1 // loop_header
      %s15 = sphi 0, %s19
      %p16 = scmp.ge.s32.totalorder %s15, 4
      %s25 = sphi 0, %s27
      %s28 = sphi 0, %s25
      %s29 = sphi 0, %s28
      %s45 = sphi 0, %s29
      %s51 = sphi 0, %s53
      %s54 = sphi 0, %s51
      %s55 = sphi 0, %s54
      %s71 = sphi 0, %s55
      %s75 = sphi 0, %s75
      %s77 = sphi 0, %s75
      %s78 = sphi 0, %s77
      %s92 = sphi 0, %s78
      %s96 = sphi 0, %s96
      %s98 = sphi 0, %s96
      %s99 = sphi 0, %s98
      %s113 = sphi 0, %s99
      %s117 = sphi 0, %s117
      %s119 = sphi 0, %s117
      %s120 = sphi 0, %s119
      %s134 = sphi 0, %s120
      %s138 = sphi 0, %s138
      %s140 = sphi 0, %s138
      %s141 = sphi 0, %s140
      %s155 = sphi 0, %s141
      %s161 = sphi 0, %s163
      %s164 = sphi 0, %s161
      %s165 = sphi 0, %s164
      %s181 = sphi 0, %s165
    $region4: #{se_layer_linear.1} parent=1 // loop_header_branch
      %18 = sbr.rel (%p16) target = $region8
    $region5: #{se_layer_linear.1} parent=1 // loop_body
      %s20 = ssub.s32 %s15, 1
      %s21 = ssub.s32 %s15, 2
      %s22 = sadd.s32 %s15, 1
      %s23 = ssub.s32 %s15, %s22
      %p24 = scmp.eq.s32.totalorder %s23, 0
      %s26 = sadd.s32 %s25, 1
      %s27 = scalar_select %p24, %s25, %s26
      %p30 = pneg %p24
      %p31 = scmp.eq.s32.totalorder %s15, 1
      %p32 = por %p30, %p31
      %p33 = scmp.ne.s32.totalorder %s25, %s28
      %p34 = scmp.eq.s32.totalorder %s15, 0
      %p35 = por %p33, %p34
      %p36 = scmp.ne.s32.totalorder %s25, %s28
      %p37 = scmp.eq.s32.totalorder %s20, 1
      %p38 = por %p36, %p37
      %p39 = scmp.ne.s32.totalorder %s28, %s29
      %p40 = scmp.eq.s32.totalorder %s20, 0
      %p41 = por %p39, %p40
      %p42 = scmp.ne.s32.totalorder %s28, %s29
      %p43 = scmp.eq.s32.totalorder %s21, 1
      %p44 = por %p42, %p43
      %p46 = scmp.ne.s32.totalorder %s29, %s45
      %p47 = scmp.eq.s32.totalorder %s21, 0
      %p48 = por %p46, %p47
      %s49 = ssub.s32 %s15, %s22
      %p50 = scmp.eq.s32.totalorder %s49, 0
      %s52 = sadd.s32 %s51, 1
      %s53 = scalar_select %p50, %s51, %s52
      %p56 = pneg %p50
      %p57 = scmp.eq.s32.totalorder %s15, 1
      %p58 = por %p56, %p57
      %p59 = scmp.ne.s32.totalorder %s51, %s54
      %p60 = scmp.eq.s32.totalorder %s15, 0
      %p61 = por %p59, %p60
      %p62 = scmp.ne.s32.totalorder %s51, %s54
      %p63 = scmp.eq.s32.totalorder %s20, 1
      %p64 = por %p62, %p63
      %p65 = scmp.ne.s32.totalorder %s54, %s55
      %p66 = scmp.eq.s32.totalorder %s20, 0
      %p67 = por %p65, %p66
      %p68 = scmp.ne.s32.totalorder %s54, %s55
      %p69 = scmp.eq.s32.totalorder %s21, 1
      %p70 = por %p68, %p69
      %p72 = scmp.ne.s32.totalorder %s55, %s71
      %p73 = scmp.eq.s32.totalorder %s21, 0
      %p74 = por %p72, %p73
      %s76 = sadd.s32 %s75, 1
      %p79 = scmp.eq.s32.totalorder %s15, 1
      %p80 = scmp.ne.s32.totalorder %s75, %s77
      %p81 = scmp.eq.s32.totalorder %s15, 0
      %p82 = por %p80, %p81
      %p83 = scmp.ne.s32.totalorder %s75, %s77
      %p84 = scmp.eq.s32.totalorder %s20, 1
      %p85 = por %p83, %p84
      %p86 = scmp.ne.s32.totalorder %s77, %s78
      %p87 = scmp.eq.s32.totalorder %s20, 0
      %p88 = por %p86, %p87
      %p89 = scmp.ne.s32.totalorder %s77, %s78
      %p90 = scmp.eq.s32.totalorder %s21, 1
      %p91 = por %p89, %p90
      %p93 = scmp.ne.s32.totalorder %s78, %s92
      %p94 = scmp.eq.s32.totalorder %s21, 0
      %p95 = por %p93, %p94
      %s97 = sadd.s32 %s96, 1
      %p100 = scmp.eq.s32.totalorder %s15, 1
      %p101 = scmp.ne.s32.totalorder %s96, %s98
      %p102 = scmp.eq.s32.totalorder %s15, 0
      %p103 = por %p101, %p102
      %p104 = scmp.ne.s32.totalorder %s96, %s98
      %p105 = scmp.eq.s32.totalorder %s20, 1
      %p106 = por %p104, %p105
      %p107 = scmp.ne.s32.totalorder %s98, %s99
      %p108 = scmp.eq.s32.totalorder %s20, 0
      %p109 = por %p107, %p108
      %p110 = scmp.ne.s32.totalorder %s98, %s99
      %p111 = scmp.eq.s32.totalorder %s21, 1
      %p112 = por %p110, %p111
      %p114 = scmp.ne.s32.totalorder %s99, %s113
      %p115 = scmp.eq.s32.totalorder %s21, 0
      %p116 = por %p114, %p115
      %s118 = sadd.s32 %s117, 1
      %p121 = scmp.eq.s32.totalorder %s15, 1
      %p122 = scmp.ne.s32.totalorder %s117, %s119
      %p123 = scmp.eq.s32.totalorder %s15, 0
      %p124 = por %p122, %p123
      %p125 = scmp.ne.s32.totalorder %s117, %s119
      %p126 = scmp.eq.s32.totalorder %s20, 1
      %p127 = por %p125, %p126
      %p128 = scmp.ne.s32.totalorder %s119, %s120
      %p129 = scmp.eq.s32.totalorder %s20, 0
      %p130 = por %p128, %p129
      %p131 = scmp.ne.s32.totalorder %s119, %s120
      %p132 = scmp.eq.s32.totalorder %s21, 1
      %p133 = por %p131, %p132
      %p135 = scmp.ne.s32.totalorder %s120, %s134
      %p136 = scmp.eq.s32.totalorder %s21, 0
      %p137 = por %p135, %p136
      %s139 = sadd.s32 %s138, 1
      %p142 = scmp.eq.s32.totalorder %s15, 1
      %p143 = scmp.ne.s32.totalorder %s138, %s140
      %p144 = scmp.eq.s32.totalorder %s15, 0
      %p145 = por %p143, %p144
      %p146 = scmp.ne.s32.totalorder %s138, %s140
      %p147 = scmp.eq.s32.totalorder %s20, 1
      %p148 = por %p146, %p147
      %p149 = scmp.ne.s32.totalorder %s140, %s141
      %p150 = scmp.eq.s32.totalorder %s20, 0
      %p151 = por %p149, %p150
      %p152 = scmp.ne.s32.totalorder %s140, %s141
      %p153 = scmp.eq.s32.totalorder %s21, 1
      %p154 = por %p152, %p153
      %p156 = scmp.ne.s32.totalorder %s141, %s155
      %p157 = scmp.eq.s32.totalorder %s21, 0
      %p158 = por %p156, %p157
      %s159 = ssub.s32 %s15, %s22
      %p160 = scmp.eq.s32.totalorder %s159, 0
      %s162 = sadd.s32 %s161, 1
      %s163 = scalar_select %p160, %s161, %s162
      %p166 = pneg %p160
      %p167 = scmp.eq.s32.totalorder %s15, 1
      %p168 = por %p166, %p167
      %p169 = scmp.ne.s32.totalorder %s161, %s164
      %p170 = scmp.eq.s32.totalorder %s15, 0
      %p171 = por %p169, %p170
      %p172 = scmp.ne.s32.totalorder %s161, %s164
      %p173 = scmp.eq.s32.totalorder %s20, 1
      %p174 = por %p172, %p173
      %p175 = scmp.ne.s32.totalorder %s164, %s165
      %p176 = scmp.eq.s32.totalorder %s20, 0
      %p177 = por %p175, %p176
      %p178 = scmp.ne.s32.totalorder %s164, %s165
      %p179 = scmp.eq.s32.totalorder %s21, 1
      %p180 = por %p178, %p179
      %p182 = scmp.ne.s32.totalorder %s165, %s181
      %p183 = scmp.eq.s32.totalorder %s21, 0
      %p184 = por %p182, %p183
      %p185 = scmp.le.s32.totalorder 1, %s15
      %p186 = scmp.lt.s32.totalorder %s15, 3
      %p187 = pnand %p185, %p186
      %p188 = pneg %p187
      // Predicated region
      $region9: #{se_layer_linear.1} parent=5 // pred_check
        _
      $region10: #{se_layer_linear.1} parent=5 // pred_check_branch
        %190 = sbr.rel (%p187) target = $region12
      $region11: #{se_layer_linear.1} parent=5 // pred_region
        %s191 = ssub.s32 %s15, 1
        // Predicated region
        $region13: #{se_layer_linear.1} parent=11 // pred_check
          %p192 = pneg %p88
        $region14: #{se_layer_linear.1} parent=11 // pred_check_branch
          %194 = sbr.rel (%p192) target = $region16
        $region15: #{se_layer_linear.1} parent=11 // pred_region
          _
        $region16: #{se_layer_linear.1} parent=11 // pred_fallthru
          _
        // Predicated region
        $region17: #{se_layer_linear.1} parent=11 // pred_check
          %p195 = pneg %p109
        $region18: #{se_layer_linear.1} parent=11 // pred_check_branch
          %197 = sbr.rel (%p195) target = $region20
        $region19: #{se_layer_linear.1} parent=11 // pred_region
          _
        $region20: #{se_layer_linear.1} parent=11 // pred_fallthru
          _
        // Predicated region
        $region21: #{se_layer_linear.1} parent=11 // pred_check
          %p198 = pneg %p130
        $region22: #{se_layer_linear.1} parent=11 // pred_check_branch
          %200 = sbr.rel (%p198) target = $region24
        $region23: #{se_layer_linear.1} parent=11 // pred_region
          _
        $region24: #{se_layer_linear.1} parent=11 // pred_fallthru
          _
        // Predicated region
        $region25: #{se_layer_linear.1} parent=11 // pred_check
          %p201 = pneg %p151
        $region26: #{se_layer_linear.1} parent=11 // pred_check_branch
          %203 = sbr.rel (%p201) target = $region28
        $region27: #{se_layer_linear.1} parent=11 // pred_region
          _
        $region28: #{se_layer_linear.1} parent=11 // pred_fallthru
          _
      $region12: #{se_layer_linear.1} parent=5 // pred_fallthru
        _
      %p204 = scmp.lt.s32.totalorder %s15, 2
      // Predicated region
      $region29: #{se_layer_linear.1} parent=5 // pred_check
        %p205 = pneg %p204
      $region30: #{se_layer_linear.1} parent=5 // pred_check_branch
        %207 = sbr.rel (%p205) target = $region32
      $region31: #{se_layer_linear.1} parent=5 // pred_region
        // Predicated region
        $region33: #{se_layer_linear.1} parent=31 // pred_check
          %p208 = pneg %p35
        $region34: #{se_layer_linear.1} parent=31 // pred_check_branch
          %210 = sbr.rel (%p208) target = $region36
        $region35: #{se_layer_linear.1} parent=31 // pred_region
          %p211 = scmp.lt.s32.totalorder %s15, 1
          %s212 = scalar_select %p211, %s15, 1
          %s213 = smul.addr %s212, 8
          %s214 = scalar_lea.vmem %s0, %s213
        $region36: #{se_layer_linear.1} parent=31 // pred_fallthru
          _
        // Predicated region
        $region37: #{se_layer_linear.1} parent=31 // pred_check
          %p215 = pneg %p61
        $region38: #{se_layer_linear.1} parent=31 // pred_check_branch
          %217 = sbr.rel (%p215) target = $region40
        $region39: #{se_layer_linear.1} parent=31 // pred_region
          %p218 = scmp.lt.s32.totalorder %s15, 1
          %s219 = scalar_select %p218, %s15, 1
          %s220 = smul.addr %s219, 8
          %s221 = scalar_lea.vmem %s1, %s220
        $region40: #{se_layer_linear.1} parent=31 // pred_fallthru
          _
      $region32: #{se_layer_linear.1} parent=5 // pred_fallthru
        _
      %p222 = scmp.le.s32.totalorder 1, %s15
      %p223 = scmp.lt.s32.totalorder %s15, 3
      %p224 = pnand %p222, %p223
      %p225 = pneg %p224
      // Predicated region
      $region41: #{se_layer_linear.1} parent=5 // pred_check
        _
      $region42: #{se_layer_linear.1} parent=5 // pred_check_branch
        %227 = sbr.rel (%p224) target = $region44
      $region43: #{se_layer_linear.1} parent=5 // pred_region
        %s228 = ssub.s32 %s15, 1
        %p229 = scmp.lt.s32.totalorder %s20, 1
        %s230 = scalar_select %p229, %s20, 1
        %s231 = smul.addr %s230, 8
        %s232 = scalar_lea.vmem %s0, %s231
        %p233 = pneg %p41
        %p234 = pneg %p38
        %p235 = scmp.lt.s32.totalorder %s20, 1
        %s236 = scalar_select %p235, %s20, 1
        %s237 = smul.addr %s236, 8
        %s238 = scalar_lea.vmem %s1, %s237
        %p239 = pneg %p67
        %p240 = pneg %p64
        %p241 = pneg %p88
        %p242 = pneg %p85
        %p243 = pneg %p109
        %p244 = pneg %p106
        %p245 = pneg %p130
        %p246 = pneg %p127
        %p247 = pneg %p151
        %p248 = pneg %p148
        %p249 = pneg %p177
        %p250 = pneg %p174
        %s251 = sand.u32 %s164, 1
        %s252 = scalar_lea.sflag [#allocation3], %s251
        %s253 = sand.u32 %s164, 1
        %s254 = smul.addr %s253, 8
        %s255 = scalar_lea.vmem [#allocation2], %s254
        %p256 = scmp.lt.s32.totalorder %s20, 1
        %s257 = scalar_select %p256, %s20, 1
        %s258 = smul.addr %s257, 8
        %s259 = scalar_lea.vmem %s0, %s258
        %p260 = scmp.lt.s32.totalorder %s20, 1
        %s261 = scalar_select %p260, %s20, 1
        %s262 = smul.addr %s261, 8
        %s263 = scalar_lea.vmem %s1, %s262
        %v265 = vld [vmem:[%s263] sm:$0xff]
        %v266 = vpack.c.bf16 %v265, %v265
        %v267 = vld [vmem:[%s2] sm:$0xf]
        %v268 = vld [vmem:[%s2 + $0x4] sm:$0xf]
        %v269 = vld [vmem:[%s2 + $0x8] sm:$0xf]
        %v270 = vld [vmem:[%s2 + $0xc] sm:$0xf]
        %v271 = vld [vmem:[%s3] sm:$0x1]
        %v273 = vlaneseq
        %v274 = vshrl.u32 %v273, 7
        %v275 = vsub.s32 0, %v274
        %v276 = vrot.slane %v271, %v275
        %v282 = vunpack.c.l.b16 %v267
        %v283 = vunpack.c.l.b16 %v268
        %v284 = vunpack.c.l.b16 %v269
        %v285 = vunpack.c.l.b16 %v270
        %v286 = vpack.c.b16 %v283, %v282
        %v287 = vpack.c.b16 %v285, %v284
        %vm290 = vcmask 261120
        %v292 = vsel %vm290, %v266, 0
        %294 = vmatprep.subr.bf16.mxu0 0
        %295 = vmatpush1.bf16.msra.mxu0 %v286
        %296 = vmatprep.subr.bf16.mxu0 0
        %297 = vmatpush1.bf16.msra.mxu0 %v287
        %298 = vmatprep.subr.bf16.mxu0 0
        %299 = vmatpush1.bf16.msra.mxu0 0
        %300 = vmatprep.subr.bf16.mxu0 0
        %301 = vmatpush1.bf16.msra.mxu0 0
        %302 = vmatprep.subr.bf16.mxu0 0
        %303 = vmatpush1.bf16.msra.mxu0 0
        %304 = vmatprep.subr.bf16.mxu0 0
        %305 = vmatpush1.bf16.msra.mxu0 0
        %306 = vmatprep.subr.bf16.mxu0 0
        %307 = vmatpush1.bf16.msra.mxu0 0
        %308 = vmatprep.subr.bf16.mxu0 0
        %309 = vmatpush1.bf16.msra.mxu0 0
        %310 = vmatprep.subr.bf16.mxu0 0
        %311 = vmatpush1.bf16.msra.mxu0 0
        %312 = vmatprep.subr.bf16.mxu0 0
        %313 = vmatpush1.bf16.msra.mxu0 0
        %314 = vmatprep.subr.bf16.mxu0 0
        %315 = vmatpush1.bf16.msra.mxu0 0
        %316 = vmatprep.subr.bf16.mxu0 0
        %317 = vmatpush1.bf16.msra.mxu0 0
        %318 = vmatprep.subr.bf16.mxu0 0
        %319 = vmatpush1.bf16.msra.mxu0 0
        %320 = vmatprep.subr.bf16.mxu0 0
        %321 = vmatpush1.bf16.msra.mxu0 0
        %322 = vmatprep.subr.bf16.mxu0 0
        %323 = vmatpush1.bf16.msra.mxu0 0
        %324 = vmatprep.subr.bf16.mxu0 0
        %325 = vmatpush1.bf16.msra.mxu0 0
        %326 = vmatprep.mubr.bf16.mxu0 0
        %327 = vmatmul.mubr.bf16.gmra.mrb[0].mxu0 %v292
        %v328 = vpop.f32.mrb[0].mxu0
        %v329 = vadd.f32 %v276, %v328
        %v330 = vpop.f32.mrb[0].mxu0
        %v331 = vpop.f32.mrb[0].mxu0
        %v332 = vpop.f32.mrb[0].mxu0
        %333 = vdwg.mxu0
        %v334 = vmax.f32 %v329, 0.0
        %v335 = vpack.c.bf16 %v334, %v334
        %v336 = vld [vmem:[%s4] sm:$0xf]
        %v337 = vld [vmem:[%s4 + $0x4] sm:$0xf]
        %v338 = vld [vmem:[%s4 + $0x8] sm:$0xf]
        %v339 = vld [vmem:[%s4 + $0xc] sm:$0xf]
        %v340 = vld [vmem:[%s5] sm:$0x1]
        %v342 = vlaneseq
        %v343 = vshrl.u32 %v342, 7
        %v344 = vsub.s32 0, %v343
        %v345 = vrot.slane %v340, %v344
        %v351 = vunpack.c.l.b16 %v336
        %v352 = vunpack.c.l.b16 %v337
        %v353 = vunpack.c.l.b16 %v338
        %v354 = vunpack.c.l.b16 %v339
        %v355 = vpack.c.b16 %v352, %v351
        %v356 = vpack.c.b16 %v354, %v353
        %v360 = vsel %vm290, %v335, 0
        %362 = vmatprep.subr.bf16.mxu0 0
        %363 = vmatpush1.bf16.msra.mxu0 %v355
        %364 = vmatprep.subr.bf16.mxu0 0
        %365 = vmatpush1.bf16.msra.mxu0 %v356
        %366 = vmatprep.subr.bf16.mxu0 0
        %367 = vmatpush1.bf16.msra.mxu0 0
        %368 = vmatprep.subr.bf16.mxu0 0
        %369 = vmatpush1.bf16.msra.mxu0 0
        %370 = vmatprep.subr.bf16.mxu0 0
        %371 = vmatpush1.bf16.msra.mxu0 0
        %372 = vmatprep.subr.bf16.mxu0 0
        %373 = vmatpush1.bf16.msra.mxu0 0
        %374 = vmatprep.subr.bf16.mxu0 0
        %375 = vmatpush1.bf16.msra.mxu0 0
        %376 = vmatprep.subr.bf16.mxu0 0
        %377 = vmatpush1.bf16.msra.mxu0 0
        %378 = vmatprep.subr.bf16.mxu0 0
        %379 = vmatpush1.bf16.msra.mxu0 0
        %380 = vmatprep.subr.bf16.mxu0 0
        %381 = vmatpush1.bf16.msra.mxu0 0
        %382 = vmatprep.subr.bf16.mxu0 0
        %383 = vmatpush1.bf16.msra.mxu0 0
        %384 = vmatprep.subr.bf16.mxu0 0
        %385 = vmatpush1.bf16.msra.mxu0 0
        %386 = vmatprep.subr.bf16.mxu0 0
        %387 = vmatpush1.bf16.msra.mxu0 0
        %388 = vmatprep.subr.bf16.mxu0 0
        %389 = vmatpush1.bf16.msra.mxu0 0
        %390 = vmatprep.subr.bf16.mxu0 0
        %391 = vmatpush1.bf16.msra.mxu0 0
        %392 = vmatprep.subr.bf16.mxu0 0
        %393 = vmatpush1.bf16.msra.mxu0 0
        %394 = vmatprep.mubr.bf16.mxu0 0
        %395 = vmatmul.mubr.bf16.gmra.mrb[0].mxu0 %v360
        %v396 = vpop.f32.mrb[0].mxu0
        %v397 = vadd.f32 %v345, %v396
        %v398 = vpop.f32.mrb[0].mxu0
        %v399 = vpop.f32.mrb[0].mxu0
        %v400 = vpop.f32.mrb[0].mxu0
        %401 = vdwg.mxu0
        %v402 = vxor.u32 %v397, 2147483648
        %v403 = vmul.f32 %v402, 1.442695
        %v404 = vpow.pop %v403
        %v405 = vadd.f32 %v404, 1.0
        %v406 = vrcp.pop %v405
        %v407 = vmul.f32 1.0, %v406
        %v408 = vld [vmem:[%s259] sm:$0xff]
        %v409 = vmul.f32 %v408, %v407
        %410 = vst.msk [vmem:[%s255] sm:$0xff] %vm290, %v409
        %s411 = sand.u32 %s164, 1
        %s412 = scalar_lea.sflag [#allocation3], %s411
        %s413 = sand.u32 %s164, 1
        %s414 = smul.addr %s413, 8
        %s415 = scalar_lea.vmem [#allocation2], %s414
        // Predicated region
        $region45: #{se_layer_linear.1} parent=43 // pred_check
          %p416 = pneg %p174
        $region46: #{se_layer_linear.1} parent=43 // pred_check_branch
          %418 = sbr.rel (%p416) target = $region48
        $region47: #{se_layer_linear.1} parent=43 // pred_region
          %s420 = ssub.s32 128, 128
          %421 = vsyncadd %s412, %s420
          %s422 = smul.addr %s20, 128
          %s423 = scalar_lea.hbm %s6, %s422
          %s425 = sshll.u32 %s415, 4
          %s426 = int_to_ptr.vmem [resolvable:$true] %s425
          %428 = dma.vmem_to_hbm [thread:$0]  %s426, 128, %s423, %s412
        $region48: #{se_layer_linear.1} parent=43 // pred_fallthru
          _
      $region44: #{se_layer_linear.1} parent=5 // pred_fallthru
        _
      %p429 = scmp.le.s32.totalorder 2, %s15
      // Predicated region
      $region49: #{se_layer_linear.1} parent=5 // pred_check
        %p430 = pneg %p429
      $region50: #{se_layer_linear.1} parent=5 // pred_check_branch
        %432 = sbr.rel (%p430) target = $region52
      $region51: #{se_layer_linear.1} parent=5 // pred_region
        %s433 = ssub.s32 %s15, 2
        // Predicated region
        $region53: #{se_layer_linear.1} parent=51 // pred_check
          %p434 = pneg %p180
        $region54: #{se_layer_linear.1} parent=51 // pred_check_branch
          %436 = sbr.rel (%p434) target = $region56
        $region55: #{se_layer_linear.1} parent=51 // pred_region
          %s437 = sand.u32 %s165, 1
          %s438 = scalar_lea.sflag [#allocation3], %s437
          %s439 = sand.u32 %s165, 1
          %s440 = smul.addr %s439, 8
          %s441 = scalar_lea.vmem [#allocation2], %s440
          %442 = dma.done %s438, 128
        $region56: #{se_layer_linear.1} parent=51 // pred_fallthru
          _
      $region52: #{se_layer_linear.1} parent=5 // pred_fallthru
        _
    $region6: #{se_layer_linear.1} parent=1 // loop_footer
      %s19 = sadd.s32 1, %s15
    $region7: #{se_layer_linear.1} parent=1 // loop_footer_branch
      %14 = sbr.rel target = $region3
    $region8: #{se_layer_linear.1} parent=1 // loop_exit
      _
    %443 = vsyncpa [#allocation3], 1
    %s444 = scalar_lea.sflag [#allocation3], 1
    %445 = vsyncpa %s444, 1

</llo_original>
